<compile_context>
chip_gen: v6e
topology: v6e:2x2x1
jax: 0.10.0
libtpu: 0.0.40
codegen_flags: <defaults>
</compile_context>

<pallas_src>
import math

import jax
import jax.numpy as jnp
from jax import lax
from jax.experimental import pallas as pl
from jax.experimental.pallas import tpu as pltpu

_LANE = 128
# Above the 16 MiB (v5e) / 32 MiB (v6e, v7x) scoped defaults, below v7x's
# 64 MiB physical VMEM; leaves headroom for double-buffered in+out + staging.
_VMEM_LIMIT_BYTES = 48 * 1024 * 1024


def _rmsnorm_kernel_batch(x_ref, g_ref, o_ref):
    """Mode A: x_ref (TB, C, L), g_ref (1, C, 1), o_ref (TB, C, L)."""
    x = x_ref[...].astype(jnp.float32)
    c = x.shape[1]
    # Sum of squares over the channel (sublane) axis -> (TB, 1, L).
    sumsq = jnp.sum(x * x, axis=1, keepdims=True)
    # torch F.normalize clamps ||x|| at 1e-12  <=>  clamp sumsq at 1e-24.
    inv = lax.rsqrt(jnp.maximum(sumsq, jnp.float32(1e-24))) * jnp.float32(math.sqrt(c))
    g = g_ref[...].astype(jnp.float32)  # (1, C, 1)
    # TODO(synk): on v6e/v7x the two output multiplies could stay in bf16 for
    # bf16 inputs; kept in f32 here (safe on v5e, kernel is HBM-bound anyway).
    o_ref[...] = ((x * inv) * g).astype(o_ref.dtype)


def _rmsnorm_kernel_lane(x_ref, g_ref, o_ref):
    """Mode B: x_ref (C, TL), g_ref (C, 1), o_ref (C, TL)."""
    x = x_ref[...].astype(jnp.float32)
    c = x.shape[0]
    sumsq = jnp.sum(x * x, axis=0, keepdims=True)  # (1, TL)
    inv = lax.rsqrt(jnp.maximum(sumsq, jnp.float32(1e-24))) * jnp.float32(math.sqrt(c))
    g = g_ref[...].astype(jnp.float32)  # (C, 1)
    o_ref[...] = ((x * inv) * g).astype(o_ref.dtype)


def rmsnorm(x, g, *, target_block_bytes=4 << 20):
    """x: (B, C, L), g: (1, C, 1) -> (B, C, L)."""
    B, C, L = x.shape
    itemsize = jnp.dtype(x.dtype).itemsize
    per_batch_bytes = C * L * itemsize

    cost = pl.CostEstimate(
        flops=4 * B * C * L,
        transcendentals=B * L,
        bytes_accessed=2 * B * C * L * itemsize + C * jnp.dtype(g.dtype).itemsize,
    )

    if 2 * per_batch_bytes <= target_block_bytes or L < _LANE:
        # ---- Mode A: batch-blocked contiguous (TB, C, L) slabs. ----
        tb = max(1, min(B, target_block_bytes // max(per_batch_bytes, 1)))
        n_steps = pl.cdiv(B, tb)
        # Give both v7x TensorCores work when there is enough traffic to matter.
        if n_steps == 1 and B > 1 and B * per_batch_bytes > (2 << 20):
            tb = pl.cdiv(B, 2)
            n_steps = pl.cdiv(B, tb)
        return pl.pallas_call(
            _rmsnorm_kernel_batch,
            out_shape=jax.ShapeDtypeStruct((B, C, L), x.dtype),
            grid_spec=pltpu.PrefetchScalarGridSpec(
                num_scalar_prefetch=0,
                grid=(n_steps,),
                in_specs=[
                    # x: full (C, L) per batch; leading dim may have a partial
                    # trailing block (discarded on writeback).
                    pl.BlockSpec((tb, C, L), lambda i: (i, 0, 0)),
                    # g: constant small (1, C, 1) block, stays resident.
                    pl.BlockSpec((1, C, 1), lambda i: (0, 0, 0)),
                ],
                out_specs=pl.BlockSpec((tb, C, L), lambda i: (i, 0, 0)),
            ),
            compiler_params=pltpu.CompilerParams(
                dimension_semantics=("parallel",),
                vmem_limit_bytes=_VMEM_LIMIT_BYTES,
            ),
            cost_estimate=cost,
        )(x, g)

    # ---- Mode B: per-batch lane blocking with a partial trailing tile. ----
    tl = (target_block_bytes // (C * itemsize)) // _LANE * _LANE
    tl = max(_LANE, tl)
    if tl >= L:
        tl = L  # full extent is always legal regardless of alignment
    return pl.pallas_call(
        _rmsnorm_kernel_lane,
        out_shape=jax.ShapeDtypeStruct((B, C, L), x.dtype),
        grid_spec=pltpu.PrefetchScalarGridSpec(
            num_scalar_prefetch=0,
            grid=(B, pl.cdiv(L, tl)),
            in_specs=[
                # x: full C per block, TL lanes; kernel sees (C, TL).
                pl.BlockSpec((pl.Squeezed(), C, tl), lambda b, l: (b, 0, l)),
                # g: constant small (C, 1) block.
                pl.BlockSpec((pl.Squeezed(), C, 1), lambda b, l: (0, 0, 0)),
            ],
            out_specs=pl.BlockSpec((pl.Squeezed(), C, tl), lambda b, l: (b, 0, l)),
        ),
        compiler_params=pltpu.CompilerParams(
            dimension_semantics=("parallel", "parallel"),
            vmem_limit_bytes=_VMEM_LIMIT_BYTES,
        ),
        cost_estimate=cost,
    )(x, g)


def rmsnorm_ref(x, g):
    """Pure-JAX reference matching the PyTorch module."""
    x32 = x.astype(jnp.float32)
    norm = jnp.sqrt(jnp.sum(x32 * x32, axis=1, keepdims=True))
    denom = jnp.maximum(norm, 1e-12)
    return (x32 / denom * g.astype(jnp.float32)
            * jnp.float32(math.sqrt(x.shape[1]))).astype(x.dtype)


if __name__ == "__main__":
    key = jax.random.PRNGKey(0)

    # Primary test: small shapes consistent with a 1D U-Net (B, C, L).
    B, C, L = 2, 4, 16
    x = jax.random.normal(key, (B, C, L), dtype=jnp.float32)
    # nn.Parameter(torch.ones(1, dim, 1)) -> deterministic ones init
    g = jnp.ones((1, C, 1), dtype=jnp.float32)

    out = jax.block_until_ready(rmsnorm(x, g))
    ref = rmsnorm_ref(x, g)
    assert out.shape == (B, C, L)
    assert jnp.allclose(out, ref, atol=1e-5, rtol=1e-5), "mismatch vs reference (mode A)"

    # Secondary test: force the lane-blocked path (partial trailing tile,
    # non-multiple-of-8 channel count) by shrinking the byte target.
    B2, C2, L2 = 2, 6, 300
    x2 = jax.random.normal(jax.random.fold_in(key, 1), (B2, C2, L2), dtype=jnp.float32)
    g2 = jnp.ones((1, C2, 1), dtype=jnp.float32)
    out2 = jax.block_until_ready(rmsnorm(x2, g2, target_block_bytes=2048))
    ref2 = rmsnorm_ref(x2, g2)
    assert out2.shape == (B2, C2, L2)
    assert jnp.allclose(out2, ref2, atol=1e-5, rtol=1e-5), "mismatch vs reference (mode B)"

    print("KERNEL_OK")
</pallas_src>

<mosaic_0001>
module attributes {stable_mosaic.version = 11 : i64} {
  func.func @_rmsnorm_kernel_batch(%arg0: i32, %arg1: memref<2x4x16xf32, #tpu.memory_space<vmem>>, %arg2: memref<1x4x1xf32, #tpu.memory_space<vmem>>, %arg3: memref<2x4x16xf32, #tpu.memory_space<vmem>>) attributes {dimension_semantics = [#tpu.dimension_semantics<parallel>], iteration_bounds = array<i64: 1>, scalar_prefetch = 0 : i64, scratch_operands = 0 : i64, tpu.core_type = #tpu.core_type<tc>, window_params = [{transform_indices = @transform_0, window_bounds = array<i64: 2, 4, 16>}, {pipeline_mode = #tpu.pipeline_mode<synchronous>, transform_indices = @transform_1, window_bounds = array<i64: 1, 4, 1>}, {transform_indices = @transform_2, window_bounds = array<i64: 2, 4, 16>}]} {
    %c0 = arith.constant 0 : index
    %c0_0 = arith.constant 0 : index
    %c0_1 = arith.constant 0 : index
    %0 = vector.load %arg1[%c0, %c0_0, %c0_1] : memref<2x4x16xf32, #tpu.memory_space<vmem>>, vector<2x4x16xf32>
    %1 = arith.mulf %0, %0 : vector<2x4x16xf32>
    %cst = arith.constant dense<0.000000e+00> : vector<2x16xf32>
    %2 = vector.multi_reduction <add>, %1, %cst [1] : vector<2x4x16xf32> to vector<2x16xf32>
    %3 = vector.shape_cast %2 : vector<2x16xf32> to vector<2x1x16xf32>
    %cst_2 = arith.constant 1.000000e-24 : f32
    %4 = vector.broadcast %cst_2 : f32 to vector<2x1x16xf32>
    %5 = arith.maximumf %3, %4 : vector<2x1x16xf32>
    %6 = math.rsqrt %5 : vector<2x1x16xf32>
    %cst_3 = arith.constant 2.000000e+00 : f32
    %7 = vector.broadcast %cst_3 : f32 to vector<2x1x16xf32>
    %8 = arith.mulf %6, %7 : vector<2x1x16xf32>
    %c0_4 = arith.constant 0 : index
    %c0_5 = arith.constant 0 : index
    %c0_6 = arith.constant 0 : index
    %9 = vector.load %arg2[%c0_4, %c0_5, %c0_6] : memref<1x4x1xf32, #tpu.memory_space<vmem>>, vector<1x4x1xf32>
    %10 = vector.broadcast %8 : vector<2x1x16xf32> to vector<2x4x16xf32>
    %11 = arith.mulf %0, %10 : vector<2x4x16xf32>
    %12 = vector.broadcast %9 : vector<1x4x1xf32> to vector<2x4x16xf32>
    %13 = arith.mulf %11, %12 : vector<2x4x16xf32>
    %c0_7 = arith.constant 0 : index
    %c0_8 = arith.constant 0 : index
    %c0_9 = arith.constant 0 : index
    %14 = vector.load %arg3[%c0_7, %c0_8, %c0_9] : memref<2x4x16xf32, #tpu.memory_space<vmem>>, vector<2x4x16xf32>
    tpu.vector_store %arg3[%c0_7, %c0_8, %c0_9], %13 {strides = array<i32>} : memref<2x4x16xf32, #tpu.memory_space<vmem>>, vector<2x4x16xf32>,
    return
  }
  func.func @transform_0(%arg0: i32) -> (i32, i32, i32) {
    %c0_i32 = arith.constant 0 : i32
    %c0_i32_0 = arith.constant 0 : i32
    %c0_i32_1 = arith.constant 0 : i32
    return %arg0, %c0_i32, %c0_i32_0 : i32, i32, i32
  }
  func.func @transform_1(%arg0: i32) -> (i32, i32, i32) {
    %c0_i32 = arith.constant 0 : i32
    %c0_i32_0 = arith.constant 0 : i32
    %c0_i32_1 = arith.constant 0 : i32
    %c0_i32_2 = arith.constant 0 : i32
    return %c0_i32, %c0_i32_0, %c0_i32_1 : i32, i32, i32
  }
  func.func @transform_2(%arg0: i32) -> (i32, i32, i32) {
    %c0_i32 = arith.constant 0 : i32
    %c0_i32_0 = arith.constant 0 : i32
    %c0_i32_1 = arith.constant 0 : i32
    return %arg0, %c0_i32, %c0_i32_0 : i32, i32, i32
  }
}

</mosaic_0001>

<llo_original>
// kernel: tpu_custom_call.1
$region0: #{tpu_custom_call.1}
  #allocation0 [shape = 'u32[]', space=smem, size = 0x4, offset = 0x4, fixed_abs, tag = 'smem constant byte address 0x4 - core index']
  #allocation1 [shape = 'u32[144,128]{1,0:T(1,128)}', space=vmem, size = 0x12000, scoped, tag = 'internal scratch']
  %s0 = inlined_call_operand.hbm [shape: f32[2,4,16], index: 0, kind: input, shape index: {}]
  %s1 = inlined_call_operand.vmem [shape: f32[1,4,1], index: 1, kind: input, shape index: {}]
  %s2 = inlined_call_operand.hbm [shape: f32[2,4,16], index: 2, kind: output, shape index: {}]
  %s3 = sld [smem:[#allocation0]]
  $region22: #{tpu_custom_call.1} parent=0
    _
  %s5 = ssub.s32 1, %s3
  %s6 = scalar_select 0, %s5, %s3
  $region1: #{tpu_custom_call.1} parent=0
    #allocation2 [shape = 'u8[4096]{0}', space=vmem, size = 0x1000, scoped, tag = 'input window, operand 0, single buffered']
    #allocation3 [shape = 's32[1]{0}', space=sflag, size = 0x4, scoped, tag = 'scoped memory for tpu_custom_call.1']
    #allocation4 [shape = 's32[1]{0}', space=sflag, size = 0x4, scoped, tag = 'scoped memory for tpu_custom_call.1']
    #allocation5 [shape = 'u8[4096]{0}', space=vmem, size = 0x1000, scoped, tag = 'output window, operand 0, single buffered']
    %7 = vsyncpa [#allocation3], 0
    %8 = vsyncpa [#allocation4], 0
    // Predicated region
    $region2: #{tpu_custom_call.1} parent=1 // pred_check
      _
    $region3: #{tpu_custom_call.1} parent=1 // pred_check_branch
      %10 = sbr.rel (0) target = $region5
    $region4: #{tpu_custom_call.1} parent=1 // pred_region
      %s12 = ssub.s32 128, 128
      %13 = vsyncadd [#allocation3], %s12
      %s14 = sshll.u32 [#allocation2], 4
      %s15 = int_to_ptr.vmem [resolvable:$true] %s14
      %20 = dma.hbm_to_vmem [thread:$0]  %s0, 128, %s15, [#allocation3], 64, 64, 4
    $region5: #{tpu_custom_call.1} parent=1 // pred_fallthru
      _
    // Predicated region
    $region6: #{tpu_custom_call.1} parent=1 // pred_check
      _
    $region7: #{tpu_custom_call.1} parent=1 // pred_check_branch
      %22 = sbr.rel (0) target = $region9
    $region8: #{tpu_custom_call.1} parent=1 // pred_region
      _
    $region9: #{tpu_custom_call.1} parent=1 // pred_fallthru
      _
    // Predicated region
    $region10: #{tpu_custom_call.1} parent=1 // pred_check
      _
    $region11: #{tpu_custom_call.1} parent=1 // pred_check_branch
      %24 = sbr.rel (0) target = $region13
    $region12: #{tpu_custom_call.1} parent=1 // pred_region
      %25 = dma.done [#allocation3], 128
    $region13: #{tpu_custom_call.1} parent=1 // pred_fallthru
      _
    %v26 = vld [vmem:[#allocation2] sm:$0xf]
    %v27 = vld [vmem:[#allocation2 + $0x4] sm:$0xf]
    %v28 = vmul.f32 %v26, %v26
    %v29 = vmul.f32 %v27, %v27
    %vm30 = vcmask 125952
    %v31 = vsel %vm30, %v28, 0.0
    %v32 = vrot.slane %v31, 4
    %v33 = vadd.f32 %v31, %v32
    %v34 = vrot.slane %v33, 2
    %v35 = vadd.f32 %v33, %v34
    %v36 = vrot.slane %v35, 1
    %v37 = vadd.f32 %v35, %v36
    %v38 = vsel %vm30, %v29, 0.0
    %v39 = vrot.slane %v38, 4
    %v40 = vadd.f32 %v38, %v39
    %v41 = vrot.slane %v40, 2
    %v42 = vadd.f32 %v40, %v41
    %v43 = vrot.slane %v42, 1
    %v44 = vadd.f32 %v42, %v43
    %v45 = vmax.f32 %v37, 1e-24
    %v46 = vmax.f32 %v44, 1e-24
    %v47 = vrsqrt.pop %v45
    %v48 = vrsqrt.pop %v46
    %v49 = vmul.f32 %v47, 2.0
    %v50 = vmul.f32 %v48, 2.0
    %v51 = vld [vmem:[%s1] sm:$0xf]
    %v52 = vmul.f32 %v26, %v49
    %v53 = vmul.f32 %v27, %v50
    %55 = vset.pattern.permute.xlu0 0
    %56 = vperm.xlu0 %55, %v51
    %v57 = vpop.permute.xlu0 %56
    %v59 = vmul.f32 %v52, %v57
    %v60 = vmul.f32 %v53, %v57
    %61 = vst.msk [vmem:[#allocation5] sm:$0xf] %vm30, %v59
    %62 = vst.msk [vmem:[#allocation5 + $0x4] sm:$0xf] %vm30, %v60
    // Predicated region
    $region14: #{tpu_custom_call.1} parent=1 // pred_check
      _
    $region15: #{tpu_custom_call.1} parent=1 // pred_check_branch
      %64 = sbr.rel (0) target = $region17
    $region16: #{tpu_custom_call.1} parent=1 // pred_region
      %s66 = ssub.s32 128, 128
      %67 = vsyncadd [#allocation4], %s66
      %s68 = sshll.u32 [#allocation5], 4
      %s69 = int_to_ptr.vmem [resolvable:$true] %s68
      %74 = dma.vmem_to_hbm [thread:$0]  %s69, 128, %s2, [#allocation4], 64, 64, 4
    $region17: #{tpu_custom_call.1} parent=1 // pred_fallthru
      _
    // Predicated region
    $region18: #{tpu_custom_call.1} parent=1 // pred_check
      _
    $region19: #{tpu_custom_call.1} parent=1 // pred_check_branch
      %76 = sbr.rel (0) target = $region21
    $region20: #{tpu_custom_call.1} parent=1 // pred_region
      %77 = dma.done [#allocation4], 128
    $region21: #{tpu_custom_call.1} parent=1 // pred_fallthru
      _
    %78 = vsyncpa [#allocation3], 1
    %79 = vsyncpa [#allocation4], 1

</llo_original>
